<compile_context>
chip_gen: v7x
topology: tpu7x:2x2x1
jax: 0.10.0
libtpu: 0.0.40
codegen_flags: <defaults>
</compile_context>

<pallas_src>
import functools

import jax
import jax.numpy as jnp
from jax.experimental import pallas as pl
from jax.experimental.pallas import tpu as pltpu


def _linear_kernel(x_ref, w_ref, b_ref, o_ref, *, chunk, n_chunks):
    # x_ref: (tb, D) VMEM (input dtype); w_ref: (1, D) VMEM; b_ref: (1,) SMEM f32;
    # o_ref: (tb, 1) VMEM f32.
    d = x_ref.shape[1]
    # Sublane-broadcast the weight row once per grid step (hoisted out of the
    # chunk loop; JAX does not CSE broadcast_in_dim).
    w8 = jnp.broadcast_to(w_ref[...], (8, d))
    bias = b_ref[0]

    def body(c, carry):
        i = c * chunk
        xs = x_ref[pl.ds(i, chunk), :]
        # Big x chunk is the moving LHS; tiny weight panel is the (transposed)
        # stationary RHS.  f32 accumulation on the MXU.
        acc = jax.lax.dot_general(
            xs, w8,
            dimension_numbers=(((1,), (1,)), ((), ())),   # contract over D
            preferred_element_type=jnp.float32,
        )                                                 # (chunk, 8), identical cols
        o_ref[pl.ds(i, chunk), :] = (acc[:, 0:1] + bias).astype(o_ref.dtype)
        return carry

    jax.lax.fori_loop(0, n_chunks, body, 0, unroll=True)


def _round_up(n, m):
    return (n + m - 1) // m * m


def preference_model_forward(x, weight, bias):
    """y = x @ weight.T + bias  (PyTorch nn.Linear(D, 1) forward).

    x: (B, D) float32/bfloat16; weight: (1, D); bias: (1,). Returns (B, 1) f32.
    """
    B, D = x.shape
    assert weight.shape == (1, D) and bias.shape == (1,)

    compute_dtype = x.dtype                        # keep bf16 inputs bf16 (HBM win)
    itemsize = jnp.dtype(compute_dtype).itemsize
    w = weight.astype(compute_dtype)               # natural (1, D) layout, no HBM panel
    b = bias.astype(jnp.float32).reshape(1)

    # Per-generation VMEM budget for the pipelined buffers (x double-buffer plus
    # the lane-padded (tb, 1) output double-buffer), with a matching scoped-VMEM
    # limit so large tiles actually compile on every generation.
    try:
        vmem_cap = pltpu.get_tpu_info().vmem_capacity_bytes
    except Exception:  # be safe if the query is unavailable
        vmem_cap = 64 * 1024 * 1024
    if vmem_cap >= 100 * 1024 * 1024:              # v5e / v6e: 128 MiB physical VMEM
        budget_bytes = 48 * 1024 * 1024
        vmem_limit = 64 * 1024 * 1024
    else:                                          # v7x: 64 MiB physical VMEM per TC
        budget_bytes = 26 * 1024 * 1024
        vmem_limit = 40 * 1024 * 1024

    # Bytes per batch row held in VMEM: double-buffered x row + double-buffered
    # lane-padded (., 1) f32 output row (padded to 128 lanes).
    per_row_bytes = 2 * (D * itemsize) + 2 * (128 * 4)
    tb = max(8, (budget_bytes // per_row_bytes) // 8 * 8)
    # Keep >= 2 tiles so both v7x TensorCores get work when B is large enough.
    tb = min(tb, _round_up(pl.cdiv(B, 2), 8))
    # Inner MXU/store chunk; keep tb a multiple of it.
    chunk = min(512, tb)
    if tb > chunk:
        tb = (tb // chunk) * chunk
    n_chunks = tb // chunk
    num_tiles = pl.cdiv(B, tb)                     # no input padding: Pallas clips

    out = pl.pallas_call(
        functools.partial(_linear_kernel, chunk=chunk, n_chunks=n_chunks),
        out_shape=jax.ShapeDtypeStruct((B, 1), jnp.float32),
        grid=(num_tiles,),
        in_specs=[
            pl.BlockSpec((tb, D), lambda i: (i, 0)),              # streamed x row tile
            pl.BlockSpec((1, D), lambda i: (0, 0)),               # resident weight row
            pl.BlockSpec(memory_space=pltpu.MemorySpace.SMEM),    # bias scalar in SMEM
        ],
        out_specs=pl.BlockSpec((tb, 1), lambda i: (i, 0)),
        compiler_params=pltpu.CompilerParams(
            dimension_semantics=("parallel",),
            vmem_limit_bytes=vmem_limit,
        ),
        cost_estimate=pl.CostEstimate(
            flops=2 * B * D,
            transcendentals=0,
            bytes_accessed=B * D * itemsize + D * itemsize + 4 * B + 4,
        ),
    )(x, w, b)

    # TODO(synk): for very large D (>= ~8K), add a trailing "arbitrary" grid axis
    # over D with an f32 VMEM accumulator (pl.when(k == 0) init) to bound the x
    # tile on v7x's 64 MiB VMEM. Unnecessary at D = 512.

    return out


if __name__ == "__main__":
    key = jax.random.PRNGKey(0)
    k_x, k_w, k_b = jax.random.split(key, 3)

    input_dim = 512
    batch = 8

    # Deterministic parameter init (synthetic, mimics PyTorch's uniform bound).
    bound = 1.0 / (input_dim ** 0.5)
    weight = jax.random.uniform(k_w, (1, input_dim), jnp.float32, -bound, bound)
    bias = jax.random.uniform(k_b, (1,), jnp.float32, -bound, bound)
    x = jax.random.normal(k_x, (batch, input_dim), jnp.float32)

    out = preference_model_forward(x, weight, bias)
    out = jax.block_until_ready(out)

    ref = x @ weight.T + bias
    assert out.shape == (batch, 1)
    assert jnp.allclose(out, ref, atol=1e-2, rtol=1e-2), float(jnp.max(jnp.abs(out - ref)))

    # Also exercise the clipped (non-divisible) final-tile path.
    x2 = jax.random.normal(k_x, (13, input_dim), jnp.float32)
    out2 = jax.block_until_ready(preference_model_forward(x2, weight, bias))
    ref2 = x2 @ weight.T + bias
    assert out2.shape == (13, 1)
    assert jnp.allclose(out2, ref2, atol=1e-2, rtol=1e-2), float(jnp.max(jnp.abs(out2 - ref2)))

    print("KERNEL_OK")
</pallas_src>

<mosaic_0001>
module attributes {stable_mosaic.version = 11 : i64} {
  func.func @_linear_kernel(%arg0: i32, %arg1: memref<8x512xf32, #tpu.memory_space<vmem>>, %arg2: memref<1x512xf32, #tpu.memory_space<vmem>>, %arg3: memref<1xf32, #tpu.memory_space<smem>>, %arg4: memref<8x1xf32, #tpu.memory_space<vmem>>) attributes {dimension_semantics = [#tpu.dimension_semantics<parallel>], iteration_bounds = array<i64: 1>, scalar_prefetch = 0 : i64, scratch_operands = 0 : i64, tpu.core_type = #tpu.core_type<tc>, window_params = [{transform_indices = @transform_0, window_bounds = array<i64: 8, 512>}, {pipeline_mode = #tpu.pipeline_mode<synchronous>, transform_indices = @transform_1, window_bounds = array<i64: 1, 512>}, {transform_indices = @transform_2, window_bounds = array<i64: 1>}, {transform_indices = @transform_3, window_bounds = array<i64: 8, 1>}]} {
    %c0 = arith.constant 0 : index
    %c0_0 = arith.constant 0 : index
    %0 = vector.load %arg2[%c0, %c0_0] : memref<1x512xf32, #tpu.memory_space<vmem>>, vector<1x512xf32>
    %1 = vector.shape_cast %0 : vector<1x512xf32> to vector<1x512xf32>
    %2 = vector.broadcast %1 : vector<1x512xf32> to vector<8x512xf32>
    %c0_1 = arith.constant 0 : index
    %3 = memref.load %arg3[%c0_1] : memref<1xf32, #tpu.memory_space<smem>>
    %c0_i32 = arith.constant 0 : i32
    %c8_i32 = arith.constant 8 : i32
    %4 = arith.muli %c0_i32, %c8_i32 : i32
    %5 = arith.index_cast %4 : i32 to index
    %c0_2 = arith.constant 0 : index
    %6 = vector.load %arg1[%5, %c0_2] : memref<8x512xf32, #tpu.memory_space<vmem>>, vector<8x512xf32>
    %cst = arith.constant dense<0.000000e+00> : vector<8x8xf32>
    %7 = tpu.matmul %6, %2, %cst {dimension_numbers = #tpu.dot_dimension_numbers<[1], [1], [0], [0], [0, 0, 1, 0], [], []>} : vector<8x512xf32>, vector<8x512xf32>, vector<8x8xf32> -> vector<8x8xf32>
    %8 = vector.extract_strided_slice %7 {offsets = [0, 0], sizes = [8, 1], strides = [1, 1]} : vector<8x8xf32> to vector<8x1xf32>
    %9 = vector.broadcast %3 : f32 to vector<8x1xf32>
    %10 = arith.addf %8, %9 : vector<8x1xf32>
    %11 = arith.index_cast %4 : i32 to index
    %c0_3 = arith.constant 0 : index
    %12 = vector.load %arg4[%11, %c0_3] : memref<8x1xf32, #tpu.memory_space<vmem>>, vector<8x1xf32>
    tpu.vector_store %arg4[%11, %c0_3], %10 {strides = array<i32>} : memref<8x1xf32, #tpu.memory_space<vmem>>, vector<8x1xf32>,
    %c1_i32 = arith.constant 1 : i32
    return
  }
  func.func @transform_0(%arg0: i32) -> (i32, i32) {
    %c0_i32 = arith.constant 0 : i32
    %c0_i32_0 = arith.constant 0 : i32
    return %arg0, %c0_i32 : i32, i32
  }
  func.func @transform_1(%arg0: i32) -> (i32, i32) {
    %c0_i32 = arith.constant 0 : i32
    %c0_i32_0 = arith.constant 0 : i32
    %c0_i32_1 = arith.constant 0 : i32
    return %c0_i32, %c0_i32_0 : i32, i32
  }
  func.func @transform_2(%arg0: i32) -> i32 {
    %c0_i32 = arith.constant 0 : i32
    %c0_i32_0 = arith.constant 0 : i32
    return %c0_i32 : i32
  }
  func.func @transform_3(%arg0: i32) -> (i32, i32) {
    %c0_i32 = arith.constant 0 : i32
    %c0_i32_0 = arith.constant 0 : i32
    return %arg0, %c0_i32 : i32, i32
  }
}

</mosaic_0001>

<llo_original>
// kernel: tpu_custom_call.1
$region0: #{tpu_custom_call.1}
  #allocation0 [shape = 'u32[]', space=smem, size = 0x4, offset = 0x4, fixed_abs, tag = 'smem constant byte address 0x4 - core index']
  #allocation1 [shape = 'u32[144,128]{1,0:T(1,128)}', space=vmem, size = 0x12000, scoped, tag = 'internal scratch']
  #allocation2 [shape = 'f32[1]{0:T(128)S(6)}', space=smem, size = 0x200, scoped, tag = 'scoped memory for tpu_custom_call.1']
  %s0 = inlined_call_operand.hbm [shape: f32[8,512], index: 0, kind: input, shape index: {}]
  %s1 = inlined_call_operand.vmem [shape: f32[1,512], index: 1, kind: input, shape index: {}]
  %s2 = inlined_call_operand.<no memory space> [shape: f32[1], index: 2, kind: input, shape index: {}]
  %s3 = inlined_call_operand.vmem [shape: f32[8,1], index: 3, kind: output, shape index: {}]
  %s4 = sld [smem:[#allocation0]]
  $region26: #{tpu_custom_call.1} parent=0
    _
  %s6 = ssub.s32 1, %s4
  %s7 = scalar_select 0, %s6, %s4
  %8 = sst [smem:[#allocation2]] %s2
  $region1: #{tpu_custom_call.1} parent=0
    #allocation3 [shape = 'u8[16384]{0}', space=vmem, size = 0x4000, scoped, tag = 'input window, operand 0, single buffered']
    #allocation4 [shape = 's32[1]{0}', space=sflag, size = 0x4, scoped, tag = 'scoped memory for tpu_custom_call.1']
    %9 = vsyncpa [#allocation4], 0
    // Predicated region
    $region2: #{tpu_custom_call.1} parent=1 // pred_check
      _
    $region3: #{tpu_custom_call.1} parent=1 // pred_check_branch
      %11 = sbr.rel (0) target = $region5
    $region4: #{tpu_custom_call.1} parent=1 // pred_region
      %s13 = ssub.s32 512, 512
      %14 = vsyncadd [#allocation4], %s13
      %s16 = sshll.u32 [#allocation3], 4
      %s17 = int_to_ptr.vmem [resolvable:$true] %s16
      %19 = dma.hbm_to_vmem [thread:$0]  %s0, 512, %s17, [#allocation4]
    $region5: #{tpu_custom_call.1} parent=1 // pred_fallthru
      _
    // Predicated region
    $region6: #{tpu_custom_call.1} parent=1 // pred_check
      _
    $region7: #{tpu_custom_call.1} parent=1 // pred_check_branch
      %21 = sbr.rel (0) target = $region9
    $region8: #{tpu_custom_call.1} parent=1 // pred_region
      _
    $region9: #{tpu_custom_call.1} parent=1 // pred_fallthru
      _
    // Predicated region
    $region10: #{tpu_custom_call.1} parent=1 // pred_check
      _
    $region11: #{tpu_custom_call.1} parent=1 // pred_check_branch
      %23 = sbr.rel (0) target = $region13
    $region12: #{tpu_custom_call.1} parent=1 // pred_region
      _
    $region13: #{tpu_custom_call.1} parent=1 // pred_fallthru
      _
    // Predicated region
    $region14: #{tpu_custom_call.1} parent=1 // pred_check
      _
    $region15: #{tpu_custom_call.1} parent=1 // pred_check_branch
      %25 = sbr.rel (0) target = $region17
    $region16: #{tpu_custom_call.1} parent=1 // pred_region
      %26 = dma.done [#allocation4], 512
    $region17: #{tpu_custom_call.1} parent=1 // pred_fallthru
      _
    %v27 = vld [vmem:[%s1] sm:$0xf]
    %v29 = vlaneseq
    %v30 = vshrl.u32 %v29, 7
    %v31 = vsub.s32 0, %v30
    %v32 = vrot.slane %v27, %v31
    %v33 = vlaneseq
    %v34 = vshrl.u32 %v33, 7
    %v35 = vsub.s32 1, %v34
    %v36 = vrot.slane %v27, %v35
    %v37 = vlaneseq
    %v38 = vshrl.u32 %v37, 7
    %v39 = vsub.s32 2, %v38
    %v40 = vrot.slane %v27, %v39
    %v41 = vlaneseq
    %v42 = vshrl.u32 %v41, 7
    %v43 = vsub.s32 3, %v42
    %v44 = vrot.slane %v27, %v43
    %s49 = sld [smem:[#allocation2]]
    %v50 = vld [vmem:[#allocation3] sm:$0xff]
    %v51 = vld [vmem:[#allocation3 + $0x8] sm:$0xff]
    %v52 = vld [vmem:[#allocation3 + $0x10] sm:$0xff]
    %v53 = vld [vmem:[#allocation3 + $0x18] sm:$0xff]
    %54 = vmatprep.subr.mxu0 %v36
    %55 = vmatpush1.xpose.msra.mxu0 %v32
    %56 = vmatprep.subr.mxu0 0.0
    %57 = vmatpush1.xpose.msra.mxu0 0.0
    %58 = vmatprep.subr.mxu0 0.0
    %59 = vmatpush1.xpose.msra.mxu0 0.0
    %60 = vmatprep.subr.mxu0 0.0
    %61 = vmatpush1.xpose.msra.mxu0 0.0
    %62 = vmatprep.subr.mxu0 0.0
    %63 = vmatpush1.xpose.msra.mxu0 0.0
    %64 = vmatprep.subr.mxu0 0.0
    %65 = vmatpush1.xpose.msra.mxu0 0.0
    %66 = vmatprep.subr.mxu0 0.0
    %67 = vmatpush1.xpose.msra.mxu0 0.0
    %68 = vmatprep.subr.mxu0 0.0
    %69 = vmatpush1.xpose.msra.mxu0 0.0
    %70 = vmatprep.subr.mxu0 0.0
    %71 = vmatpush1.xpose.msra.mxu0 0.0
    %72 = vmatprep.subr.mxu0 0.0
    %73 = vmatpush1.xpose.msra.mxu0 0.0
    %74 = vmatprep.subr.mxu0 0.0
    %75 = vmatpush1.xpose.msra.mxu0 0.0
    %76 = vmatprep.subr.mxu0 0.0
    %77 = vmatpush1.xpose.msra.mxu0 0.0
    %78 = vmatprep.subr.mxu0 0.0
    %79 = vmatpush1.xpose.msra.mxu0 0.0
    %80 = vmatprep.subr.mxu0 0.0
    %81 = vmatpush1.xpose.msra.mxu0 0.0
    %82 = vmatprep.subr.mxu0 0.0
    %83 = vmatpush1.xpose.msra.mxu0 0.0
    %84 = vmatprep.subr.mxu0 0.0
    %85 = vmatpush1.xpose.msra.mxu0 0.0
    %86 = vmatprep.subr.mxu0 0.0
    %87 = vmatpush1.xpose.msra.mxu0 0.0
    %88 = vmatprep.subr.mxu0 0.0
    %89 = vmatpush1.xpose.msra.mxu0 0.0
    %90 = vmatprep.subr.mxu0 0.0
    %91 = vmatpush1.xpose.msra.mxu0 0.0
    %92 = vmatprep.subr.mxu0 0.0
    %93 = vmatpush1.xpose.msra.mxu0 0.0
    %94 = vmatprep.subr.mxu0 0.0
    %95 = vmatpush1.xpose.msra.mxu0 0.0
    %96 = vmatprep.subr.mxu0 0.0
    %97 = vmatpush1.xpose.msra.mxu0 0.0
    %98 = vmatprep.subr.mxu0 0.0
    %99 = vmatpush1.xpose.msra.mxu0 0.0
    %100 = vmatprep.subr.mxu0 0.0
    %101 = vmatpush1.xpose.msra.mxu0 0.0
    %102 = vmatprep.subr.mxu0 0.0
    %103 = vmatpush1.xpose.msra.mxu0 0.0
    %104 = vmatprep.subr.mxu0 0.0
    %105 = vmatpush1.xpose.msra.mxu0 0.0
    %106 = vmatprep.subr.mxu0 0.0
    %107 = vmatpush1.xpose.msra.mxu0 0.0
    %108 = vmatprep.subr.mxu0 0.0
    %109 = vmatpush1.xpose.msra.mxu0 0.0
    %110 = vmatprep.subr.mxu0 0.0
    %111 = vmatpush1.xpose.msra.mxu0 0.0
    %112 = vmatprep.subr.mxu0 0.0
    %113 = vmatpush1.xpose.msra.mxu0 0.0
    %114 = vmatprep.subr.mxu0 0.0
    %115 = vmatpush1.xpose.msra.mxu0 0.0
    %116 = vmatprep.subr.mxu0 0.0
    %117 = vmatpush1.xpose.msra.mxu0 0.0
    %118 = vmatprep.mubr.f32.mxu0 %v51
    %119 = vmatmul.mubr.f32.gmra.mrb[0].mxu0 %v50
    %v120 = vpop.f32.mrb[0].mxu0
    %v121 = vadd.f32 0.0, %v120
    %v122 = vpop.f32.mrb[0].mxu0
    %123 = vdwg.mxu0
    %124 = vmatprep.subr.mxu0 %v44
    %125 = vmatpush1.xpose.msra.mxu0 %v40
    %126 = vmatprep.subr.mxu0 0.0
    %127 = vmatpush1.xpose.msra.mxu0 0.0
    %128 = vmatprep.subr.mxu0 0.0
    %129 = vmatpush1.xpose.msra.mxu0 0.0
    %130 = vmatprep.subr.mxu0 0.0
    %131 = vmatpush1.xpose.msra.mxu0 0.0
    %132 = vmatprep.subr.mxu0 0.0
    %133 = vmatpush1.xpose.msra.mxu0 0.0
    %134 = vmatprep.subr.mxu0 0.0
    %135 = vmatpush1.xpose.msra.mxu0 0.0
    %136 = vmatprep.subr.mxu0 0.0
    %137 = vmatpush1.xpose.msra.mxu0 0.0
    %138 = vmatprep.subr.mxu0 0.0
    %139 = vmatpush1.xpose.msra.mxu0 0.0
    %140 = vmatprep.subr.mxu0 0.0
    %141 = vmatpush1.xpose.msra.mxu0 0.0
    %142 = vmatprep.subr.mxu0 0.0
    %143 = vmatpush1.xpose.msra.mxu0 0.0
    %144 = vmatprep.subr.mxu0 0.0
    %145 = vmatpush1.xpose.msra.mxu0 0.0
    %146 = vmatprep.subr.mxu0 0.0
    %147 = vmatpush1.xpose.msra.mxu0 0.0
    %148 = vmatprep.subr.mxu0 0.0
    %149 = vmatpush1.xpose.msra.mxu0 0.0
    %150 = vmatprep.subr.mxu0 0.0
    %151 = vmatpush1.xpose.msra.mxu0 0.0
    %152 = vmatprep.subr.mxu0 0.0
    %153 = vmatpush1.xpose.msra.mxu0 0.0
    %154 = vmatprep.subr.mxu0 0.0
    %155 = vmatpush1.xpose.msra.mxu0 0.0
    %156 = vmatprep.subr.mxu0 0.0
    %157 = vmatpush1.xpose.msra.mxu0 0.0
    %158 = vmatprep.subr.mxu0 0.0
    %159 = vmatpush1.xpose.msra.mxu0 0.0
    %160 = vmatprep.subr.mxu0 0.0
    %161 = vmatpush1.xpose.msra.mxu0 0.0
    %162 = vmatprep.subr.mxu0 0.0
    %163 = vmatpush1.xpose.msra.mxu0 0.0
    %164 = vmatprep.subr.mxu0 0.0
    %165 = vmatpush1.xpose.msra.mxu0 0.0
    %166 = vmatprep.subr.mxu0 0.0
    %167 = vmatpush1.xpose.msra.mxu0 0.0
    %168 = vmatprep.subr.mxu0 0.0
    %169 = vmatpush1.xpose.msra.mxu0 0.0
    %170 = vmatprep.subr.mxu0 0.0
    %171 = vmatpush1.xpose.msra.mxu0 0.0
    %172 = vmatprep.subr.mxu0 0.0
    %173 = vmatpush1.xpose.msra.mxu0 0.0
    %174 = vmatprep.subr.mxu0 0.0
    %175 = vmatpush1.xpose.msra.mxu0 0.0
    %176 = vmatprep.subr.mxu0 0.0
    %177 = vmatpush1.xpose.msra.mxu0 0.0
    %178 = vmatprep.subr.mxu0 0.0
    %179 = vmatpush1.xpose.msra.mxu0 0.0
    %180 = vmatprep.subr.mxu0 0.0
    %181 = vmatpush1.xpose.msra.mxu0 0.0
    %182 = vmatprep.subr.mxu0 0.0
    %183 = vmatpush1.xpose.msra.mxu0 0.0
    %184 = vmatprep.subr.mxu0 0.0
    %185 = vmatpush1.xpose.msra.mxu0 0.0
    %186 = vmatprep.subr.mxu0 0.0
    %187 = vmatpush1.xpose.msra.mxu0 0.0
    %188 = vmatprep.mubr.f32.mxu0 %v53
    %189 = vmatmul.mubr.f32.gmra.mrb[0].mxu0 %v52
    %v190 = vpop.f32.mrb[0].mxu0
    %v191 = vadd.f32 %v121, %v190
    %v192 = vpop.f32.mrb[0].mxu0
    %193 = vdwg.mxu0
    %v194 = vstv %s49
    %v195 = vadd.f32 %v191, %v194
    %vm196 = vcmask 7168
    %197 = vst.msk [vmem:[%s3] sm:$0xff] %vm196, %v195
    // Predicated region
    $region18: #{tpu_custom_call.1} parent=1 // pred_check
      _
    $region19: #{tpu_custom_call.1} parent=1 // pred_check_branch
      %199 = sbr.rel (0) target = $region21
    $region20: #{tpu_custom_call.1} parent=1 // pred_region
      _
    $region21: #{tpu_custom_call.1} parent=1 // pred_fallthru
      _
    // Predicated region
    $region22: #{tpu_custom_call.1} parent=1 // pred_check
      _
    $region23: #{tpu_custom_call.1} parent=1 // pred_check_branch
      %201 = sbr.rel (0) target = $region25
    $region24: #{tpu_custom_call.1} parent=1 // pred_region
      _
    $region25: #{tpu_custom_call.1} parent=1 // pred_fallthru
      _
    %202 = vsyncpa [#allocation4], 1

</llo_original>
